<compile_context>
chip_gen: v7x
topology: tpu7x:2x2x1
jax: 0.10.0
libtpu: 0.0.40
codegen_flags: <defaults>
</compile_context>

<pallas_src>
import math

import jax
import jax.numpy as jnp
from jax.experimental import pallas as pl
from jax.experimental.pallas import tpu as pltpu


def _time2vec_kernel(x_ref, m_ref, b_ref, mask_ref, out_ref):
    # x_ref   : (TN, D)      block of flattened inputs
    # m_ref   : (D, D*K)     M[d, d*K + k] = w_full[d, k], zero elsewhere
    # b_ref   : (1, D*K)     b_lane[0, d*K + k] = b_full[d, k]
    # mask_ref: (1, D*K)     1.0 on linear (k == 0) lanes, 0.0 elsewhere
    # out_ref : (TN, D*K)    lane-dense output slab
    x = x_ref[...]                                            # (TN, D)

    # phase[n, d*K + k] = w_full[d, k] * x[n, d] + b_full[d, k]
    phase = jnp.dot(x, m_ref[...], preferred_element_type=jnp.float32)
    phase = phase + b_ref[...]                                # sublane bcast

    lin = mask_ref[...] > 0.5                                 # (1, D*K) bool
    out_ref[...] = jnp.where(lin, phase, jnp.sin(phase)).astype(out_ref.dtype)


def time2vec(x, w0, b0, w, b, *, tn=4096):
    """x: (..., D).  Returns (..., D, K) with K = output_dim."""
    *batch_dims, D = x.shape
    K = w.shape[1] + 1
    DK = D * K
    N = math.prod(batch_dims) if batch_dims else 1
    out_dtype = x.dtype

    # ---- Parameter packing (plain JAX glue, done once per call) ----
    w_full = jnp.concatenate([w0[:, None], w], axis=1)        # (D, K)
    b_full = jnp.concatenate([b0[:, None], b], axis=1)        # (D, K)

    # M[d, d*K + k] = w_full[d, k]; zero off the "block diagonal".
    eye = jnp.eye(D, dtype=jnp.float32)                       # (D, D)
    M = (eye[:, :, None] * w_full[None, :, :].astype(jnp.float32)).reshape(D, DK)
    b_lane = b_full.reshape(1, DK).astype(jnp.float32)
    lane_mask = (
        jnp.zeros((D, K), dtype=jnp.float32).at[:, 0].set(1.0).reshape(1, DK)
    )

    x2 = x.reshape(N, D).astype(jnp.float32)

    # ---- Tiling over the flattened batch axis (VMEM-budget aware) ----
    # Keep the double-buffered output tile <= ~4 MiB so (out + in + params)
    # fits comfortably under the default scoped-VMEM limit on v5e/v6e/v7x.
    out_budget_bytes = 4 << 20
    tn_cap = max(8, out_budget_bytes // (DK * 4))
    TN = min(tn, tn_cap, N)
    if TN >= 8:
        TN = (TN // 8) * 8                    # sublane-aligned tile
    n_blocks = pl.cdiv(N, TN)
    N_pad = n_blocks * TN
    if N_pad != N:
        x2 = jnp.pad(x2, ((0, N_pad - N), (0, 0)))

    out = pl.pallas_call(
        _time2vec_kernel,
        out_shape=jax.ShapeDtypeStruct((N_pad, DK), jnp.float32),
        grid=(n_blocks,),
        in_specs=[
            pl.BlockSpec((TN, D), lambda i: (i, 0)),          # x block
            pl.BlockSpec((D, DK), lambda i: (0, 0)),          # M (replicated)
            pl.BlockSpec((1, DK), lambda i: (0, 0)),          # b_lane
            pl.BlockSpec((1, DK), lambda i: (0, 0)),          # lane mask
        ],
        out_specs=pl.BlockSpec((TN, DK), lambda i: (i, 0)),
        compiler_params=pltpu.CompilerParams(
            dimension_semantics=("parallel",)),
    )(x2, M, b_lane, lane_mask)

    if N_pad != N:
        out = out[:N]
    return out.reshape(*batch_dims, D, K).astype(out_dtype)


def time2vec_ref(x, w0, b0, w, b):
    """Pure-JAX reference matching the PyTorch forward exactly."""
    v = w0 * x + b0                                              # (..., D)
    periodic = jnp.sin(w * x[..., None] + b)                     # (..., D, K-1)
    return jnp.concatenate([v[..., None], periodic], axis=-1)    # (..., D, K)


if __name__ == "__main__":
    input_dim = 16
    output_dim = 8
    B, T = 2, 8  # x shape (B, T, input_dim)

    key = jax.random.PRNGKey(0)
    kx, kw0, kb0, kw, kb = jax.random.split(key, 5)

    x = jax.random.normal(kx, (B, T, input_dim), dtype=jnp.float32)
    w0 = jax.random.normal(kw0, (input_dim,), dtype=jnp.float32)
    b0 = jax.random.normal(kb0, (input_dim,), dtype=jnp.float32)
    w = jax.random.normal(kw, (input_dim, output_dim - 1), dtype=jnp.float32)
    b = jax.random.normal(kb, (input_dim, output_dim - 1), dtype=jnp.float32)

    out = time2vec(x, w0, b0, w, b)
    out = jax.block_until_ready(out)

    ref = time2vec_ref(x, w0, b0, w, b)
    assert out.shape == (B, T, input_dim, output_dim), out.shape
    assert jnp.allclose(out, ref, atol=1e-5, rtol=1e-5), "mismatch vs reference"

    print("KERNEL_OK")
</pallas_src>

<mosaic_0001>
module attributes {stable_mosaic.version = 11 : i64} {
  func.func @_time2vec_kernel(%arg0: i32, %arg1: memref<16x16xf32, #tpu.memory_space<vmem>>, %arg2: memref<16x128xf32, #tpu.memory_space<vmem>>, %arg3: memref<1x128xf32, #tpu.memory_space<vmem>>, %arg4: memref<1x128xf32, #tpu.memory_space<vmem>>, %arg5: memref<16x128xf32, #tpu.memory_space<vmem>>) attributes {dimension_semantics = [#tpu.dimension_semantics<parallel>], iteration_bounds = array<i64: 1>, scalar_prefetch = 0 : i64, scratch_operands = 0 : i64, tpu.core_type = #tpu.core_type<tc>, window_params = [{transform_indices = @transform_0, window_bounds = array<i64: 16, 16>}, {pipeline_mode = #tpu.pipeline_mode<synchronous>, transform_indices = @transform_1, window_bounds = array<i64: 16, 128>}, {pipeline_mode = #tpu.pipeline_mode<synchronous>, transform_indices = @transform_2, window_bounds = array<i64: 1, 128>}, {pipeline_mode = #tpu.pipeline_mode<synchronous>, transform_indices = @transform_3, window_bounds = array<i64: 1, 128>}, {transform_indices = @transform_4, window_bounds = array<i64: 16, 128>}]} {
    %c0 = arith.constant 0 : index
    %c0_0 = arith.constant 0 : index
    %0 = vector.load %arg1[%c0, %c0_0] : memref<16x16xf32, #tpu.memory_space<vmem>>, vector<16x16xf32>
    %c0_1 = arith.constant 0 : index
    %c0_2 = arith.constant 0 : index
    %1 = vector.load %arg2[%c0_1, %c0_2] : memref<16x128xf32, #tpu.memory_space<vmem>>, vector<16x128xf32>
    %cst = arith.constant dense<0.000000e+00> : vector<16x128xf32>
    %2 = tpu.matmul %0, %1, %cst {dimension_numbers = #tpu.dot_dimension_numbers<[1], [0], [0], [1], [0, 0, 1, 1], [], []>} : vector<16x16xf32>, vector<16x128xf32>, vector<16x128xf32> -> vector<16x128xf32>
    %c0_3 = arith.constant 0 : index
    %c0_4 = arith.constant 0 : index
    %3 = vector.load %arg3[%c0_3, %c0_4] : memref<1x128xf32, #tpu.memory_space<vmem>>, vector<1x128xf32>
    %4 = vector.broadcast %3 : vector<1x128xf32> to vector<16x128xf32>
    %5 = arith.addf %2, %4 : vector<16x128xf32>
    %c0_5 = arith.constant 0 : index
    %c0_6 = arith.constant 0 : index
    %6 = vector.load %arg4[%c0_5, %c0_6] : memref<1x128xf32, #tpu.memory_space<vmem>>, vector<1x128xf32>
    %cst_7 = arith.constant 5.000000e-01 : f32
    %7 = vector.broadcast %cst_7 : f32 to vector<1x128xf32>
    %8 = arith.cmpf ogt, %6, %7 : vector<1x128xf32>
    %9 = math.sin %5 : vector<16x128xf32>
    %10 = vector.shape_cast %8 : vector<1x128xi1> to vector<1x128xi1>
    %11 = vector.broadcast %10 : vector<1x128xi1> to vector<16x128xi1>
    %12 = arith.select %11, %5, %9 : vector<16x128xi1>, vector<16x128xf32>
    %c0_8 = arith.constant 0 : index
    %c0_9 = arith.constant 0 : index
    %13 = vector.load %arg5[%c0_8, %c0_9] : memref<16x128xf32, #tpu.memory_space<vmem>>, vector<16x128xf32>
    tpu.vector_store %arg5[%c0_8, %c0_9], %12 {strides = array<i32>} : memref<16x128xf32, #tpu.memory_space<vmem>>, vector<16x128xf32>,
    return
  }
  func.func @transform_0(%arg0: i32) -> (i32, i32) {
    %c0_i32 = arith.constant 0 : i32
    %c0_i32_0 = arith.constant 0 : i32
    return %arg0, %c0_i32 : i32, i32
  }
  func.func @transform_1(%arg0: i32) -> (i32, i32) {
    %c0_i32 = arith.constant 0 : i32
    %c0_i32_0 = arith.constant 0 : i32
    %c0_i32_1 = arith.constant 0 : i32
    return %c0_i32, %c0_i32_0 : i32, i32
  }
  func.func @transform_2(%arg0: i32) -> (i32, i32) {
    %c0_i32 = arith.constant 0 : i32
    %c0_i32_0 = arith.constant 0 : i32
    %c0_i32_1 = arith.constant 0 : i32
    return %c0_i32, %c0_i32_0 : i32, i32
  }
  func.func @transform_3(%arg0: i32) -> (i32, i32) {
    %c0_i32 = arith.constant 0 : i32
    %c0_i32_0 = arith.constant 0 : i32
    %c0_i32_1 = arith.constant 0 : i32
    return %c0_i32, %c0_i32_0 : i32, i32
  }
  func.func @transform_4(%arg0: i32) -> (i32, i32) {
    %c0_i32 = arith.constant 0 : i32
    %c0_i32_0 = arith.constant 0 : i32
    return %arg0, %c0_i32 : i32, i32
  }
}

</mosaic_0001>

<llo_original>
// kernel: tpu_custom_call.1
$region0: #{tpu_custom_call.1}
  #allocation0 [shape = 'u32[]', space=smem, size = 0x4, offset = 0x4, fixed_abs, tag = 'smem constant byte address 0x4 - core index']
  #allocation1 [shape = 'u32[144,128]{1,0:T(1,128)}', space=vmem, size = 0x12000, scoped, tag = 'internal scratch']
  %s0 = inlined_call_operand.hbm [shape: f32[16,16], index: 0, kind: input, shape index: {}]
  %s1 = inlined_call_operand.hbm [shape: f32[16,128], index: 1, kind: input, shape index: {}]
  %s2 = inlined_call_operand.vmem [shape: f32[1,128], index: 2, kind: input, shape index: {}]
  %s3 = inlined_call_operand.vmem [shape: f32[1,128], index: 3, kind: input, shape index: {}]
  %s4 = inlined_call_operand.hbm [shape: f32[16,128], index: 4, kind: output, shape index: {}]
  %s5 = sld [smem:[#allocation0]]
  $region34: #{tpu_custom_call.1} parent=0
    _
  %s7 = ssub.s32 1, %s5
  %s8 = scalar_select 0, %s7, %s5
  $region1: #{tpu_custom_call.1} parent=0
    #allocation2 [shape = 'u8[8192]{0}', space=vmem, size = 0x2000, scoped, tag = 'input window, operand 0, single buffered']
    #allocation3 [shape = 's32[1]{0}', space=sflag, size = 0x4, scoped, tag = 'scoped memory for tpu_custom_call.1']
    #allocation4 [shape = 's32[1]{0}', space=sflag, size = 0x4, scoped, tag = 'scoped memory for tpu_custom_call.1']
    #allocation5 [shape = 'u8[8192]{0}', space=vmem, size = 0x2000, scoped, tag = 'input window, operand 1, single buffered']
    #allocation6 [shape = 's32[1]{0}', space=sflag, size = 0x4, scoped, tag = 'scoped memory for tpu_custom_call.1']
    #allocation7 [shape = 'u8[8192]{0}', space=vmem, size = 0x2000, scoped, tag = 'output window, operand 0, single buffered']
    %9 = vsyncpa [#allocation3], 0
    %10 = vsyncpa [#allocation6], 0
    %11 = vsyncpa [#allocation4], 0
    // Predicated region
    $region2: #{tpu_custom_call.1} parent=1 // pred_check
      _
    $region3: #{tpu_custom_call.1} parent=1 // pred_check_branch
      %13 = sbr.rel (0) target = $region5
    $region4: #{tpu_custom_call.1} parent=1 // pred_region
      %s15 = ssub.s32 256, 256
      %16 = vsyncadd [#allocation3], %s15
      %s17 = sshll.u32 [#allocation2], 4
      %s18 = int_to_ptr.vmem [resolvable:$true] %s17
      %23 = dma.hbm_to_vmem [thread:$0]  %s0, 256, %s18, [#allocation3], 128, 128, 8
    $region5: #{tpu_custom_call.1} parent=1 // pred_fallthru
      _
    // Predicated region
    $region6: #{tpu_custom_call.1} parent=1 // pred_check
      _
    $region7: #{tpu_custom_call.1} parent=1 // pred_check_branch
      %25 = sbr.rel (0) target = $region9
    $region8: #{tpu_custom_call.1} parent=1 // pred_region
      %s27 = ssub.s32 256, 256
      %28 = vsyncadd [#allocation6], %s27
      %s29 = sshll.u32 [#allocation5], 4
      %s30 = int_to_ptr.vmem [resolvable:$true] %s29
      %35 = dma.hbm_to_vmem [thread:$0]  %s1, 256, %s30, [#allocation6], 128, 128, 8
    $region9: #{tpu_custom_call.1} parent=1 // pred_fallthru
      _
    // Predicated region
    $region10: #{tpu_custom_call.1} parent=1 // pred_check
      _
    $region11: #{tpu_custom_call.1} parent=1 // pred_check_branch
      %37 = sbr.rel (0) target = $region13
    $region12: #{tpu_custom_call.1} parent=1 // pred_region
      _
    $region13: #{tpu_custom_call.1} parent=1 // pred_fallthru
      _
    // Predicated region
    $region14: #{tpu_custom_call.1} parent=1 // pred_check
      _
    $region15: #{tpu_custom_call.1} parent=1 // pred_check_branch
      %39 = sbr.rel (0) target = $region17
    $region16: #{tpu_custom_call.1} parent=1 // pred_region
      _
    $region17: #{tpu_custom_call.1} parent=1 // pred_fallthru
      _
    // Predicated region
    $region18: #{tpu_custom_call.1} parent=1 // pred_check
      _
    $region19: #{tpu_custom_call.1} parent=1 // pred_check_branch
      %41 = sbr.rel (0) target = $region21
    $region20: #{tpu_custom_call.1} parent=1 // pred_region
      %42 = dma.done [#allocation3], 256
    $region21: #{tpu_custom_call.1} parent=1 // pred_fallthru
      _
    // Predicated region
    $region22: #{tpu_custom_call.1} parent=1 // pred_check
      _
    $region23: #{tpu_custom_call.1} parent=1 // pred_check_branch
      %44 = sbr.rel (0) target = $region25
    $region24: #{tpu_custom_call.1} parent=1 // pred_region
      %45 = dma.done [#allocation6], 256
    $region25: #{tpu_custom_call.1} parent=1 // pred_fallthru
      _
    %v46 = vld [vmem:[#allocation2] sm:$0xff]
    %v47 = vld [vmem:[#allocation2 + $0x8] sm:$0xff]
    %v48 = vld [vmem:[#allocation5] sm:$0xff]
    %v49 = vld [vmem:[#allocation5 + $0x8] sm:$0xff]
    %v50 = vld [vmem:[%s2] sm:$0x1]
    %v52 = vlaneseq
    %v53 = vshrl.u32 %v52, 7
    %v54 = vsub.s32 0, %v53
    %v55 = vrot.slane %v50, %v54
    %vm57 = vcmask 130048
    %v59 = vsel %vm57, %v46, 0
    %v62 = vsel %vm57, %v47, 0
    %64 = vmatprep.subr.mxu0 0.0
    %65 = vmatpush1.msra.mxu0 %v48
    %66 = vmatprep.subr.mxu0 0.0
    %67 = vmatpush1.msra.mxu0 %v49
    %68 = vmatprep.subr.mxu0 0.0
    %69 = vmatpush1.msra.mxu0 0.0
    %70 = vmatprep.subr.mxu0 0.0
    %71 = vmatpush1.msra.mxu0 0.0
    %72 = vmatprep.subr.mxu0 0.0
    %73 = vmatpush1.msra.mxu0 0.0
    %74 = vmatprep.subr.mxu0 0.0
    %75 = vmatpush1.msra.mxu0 0.0
    %76 = vmatprep.subr.mxu0 0.0
    %77 = vmatpush1.msra.mxu0 0.0
    %78 = vmatprep.subr.mxu0 0.0
    %79 = vmatpush1.msra.mxu0 0.0
    %80 = vmatprep.subr.mxu0 0.0
    %81 = vmatpush1.msra.mxu0 0.0
    %82 = vmatprep.subr.mxu0 0.0
    %83 = vmatpush1.msra.mxu0 0.0
    %84 = vmatprep.subr.mxu0 0.0
    %85 = vmatpush1.msra.mxu0 0.0
    %86 = vmatprep.subr.mxu0 0.0
    %87 = vmatpush1.msra.mxu0 0.0
    %88 = vmatprep.subr.mxu0 0.0
    %89 = vmatpush1.msra.mxu0 0.0
    %90 = vmatprep.subr.mxu0 0.0
    %91 = vmatpush1.msra.mxu0 0.0
    %92 = vmatprep.subr.mxu0 0.0
    %93 = vmatpush1.msra.mxu0 0.0
    %94 = vmatprep.subr.mxu0 0.0
    %95 = vmatpush1.msra.mxu0 0.0
    %96 = vmatprep.subr.mxu0 0.0
    %97 = vmatpush1.msra.mxu0 0.0
    %98 = vmatprep.subr.mxu0 0.0
    %99 = vmatpush1.msra.mxu0 0.0
    %100 = vmatprep.subr.mxu0 0.0
    %101 = vmatpush1.msra.mxu0 0.0
    %102 = vmatprep.subr.mxu0 0.0
    %103 = vmatpush1.msra.mxu0 0.0
    %104 = vmatprep.subr.mxu0 0.0
    %105 = vmatpush1.msra.mxu0 0.0
    %106 = vmatprep.subr.mxu0 0.0
    %107 = vmatpush1.msra.mxu0 0.0
    %108 = vmatprep.subr.mxu0 0.0
    %109 = vmatpush1.msra.mxu0 0.0
    %110 = vmatprep.subr.mxu0 0.0
    %111 = vmatpush1.msra.mxu0 0.0
    %112 = vmatprep.subr.mxu0 0.0
    %113 = vmatpush1.msra.mxu0 0.0
    %114 = vmatprep.subr.mxu0 0.0
    %115 = vmatpush1.msra.mxu0 0.0
    %116 = vmatprep.subr.mxu0 0.0
    %117 = vmatpush1.msra.mxu0 0.0
    %118 = vmatprep.subr.mxu0 0.0
    %119 = vmatpush1.msra.mxu0 0.0
    %120 = vmatprep.subr.mxu0 0.0
    %121 = vmatpush1.msra.mxu0 0.0
    %122 = vmatprep.subr.mxu0 0.0
    %123 = vmatpush1.msra.mxu0 0.0
    %124 = vmatprep.subr.mxu0 0.0
    %125 = vmatpush1.msra.mxu0 0.0
    %126 = vmatprep.subr.mxu0 0.0
    %127 = vmatpush1.msra.mxu0 0.0
    %128 = vmatprep.mubr.f32.mxu0 0.0
    %129 = vmatmul.mubr.f32.gmra.mrb[0].mxu0 %v59
    %v130 = vpop.f32.mrb[0].mxu0
    %v131 = vadd.f32 %v55, %v130
    %v132 = vpop.f32.mrb[0].mxu0
    %133 = vmatprep.mubr.f32.mxu0 0.0
    %134 = vmatmul.mubr.f32.gmra.mrb[0].mxu0 %v62
    %v135 = vpop.f32.mrb[0].mxu0
    %v136 = vadd.f32 %v55, %v135
    %v137 = vpop.f32.mrb[0].mxu0
    %138 = vdwg.mxu0
    %v139 = vld [vmem:[%s3] sm:$0x1]
    %vm140 = vcmp.gt.f32.partialorder %v139, 0.5
    %v141 = vand.u32 2147483647, %v131
    %vm142 = vcmp.le.f32.partialorder %v141, 0.7853982
    %vm143 = vcmp.lt.s32.totalorder %v131, 0
    %v144 = vand.u32 %v131, 2139095040
    %v145 = vshrl.u32 %v144, 23
    %v146 = vsub.s32 %v145, 127
    %v147 = vand.u32 2147483647, %v131
    %v148 = vand.u32 %v147, 8388607
    %v149 = vor.u32 %v148, 8388608
    %v150 = vsub.s32 0, %v149
    %v151 = vadd.s32 %v146, 1
    %vm152 = vcmp.gt.s32.totalorder %v151, 0
    %v153 = vsel %vm152, %v151, 0
    %v154 = vshrl.u32 %v153, 5
    %v155 = vand.u32 %v153, 31
    %v156 = vsub.s32 32, %v155
    %v157 = vshrl.u32 683565275, %v156
    %v158 = vshll.u32 683565275, %v155
    %v159 = vshrl.u32 2475754826, %v156
    %v160 = vor.u32 %v158, %v159
    %v161 = vshll.u32 2475754826, %v155
    %v162 = vshrl.u32 2131351028, %v156
    %v163 = vor.u32 %v161, %v162
    %v164 = vshll.u32 2131351028, %v155
    %v165 = vshrl.u32 2102212464, %v156
    %v166 = vor.u32 %v164, %v165
    %v167 = vshll.u32 2102212464, %v155
    %v168 = vshrl.u32 920167782, %v156
    %v169 = vor.u32 %v167, %v168
    %v170 = vshll.u32 920167782, %v155
    %v171 = vshrl.u32 1326507024, %v156
    %v172 = vor.u32 %v170, %v171
    %vm173 = vcmp.lt.s32.totalorder %v154, 1
    %vm174 = vcmp.lt.s32.totalorder %v154, 2
    %vm175 = vcmp.lt.s32.totalorder %v154, 3
    %vm176 = vcmp.lt.s32.totalorder %v154, 4
    %v177 = vsel %vm173, %v157, %v160
    %v178 = vsel %vm176, %v166, 2102212464
    %v179 = vsel %vm175, %v163, %v178
    %v180 = vsel %vm174, %v177, %v179
    %v181 = vsel %vm173, %v160, %v163
    %v182 = vsel %vm176, %v169, 920167782
    %v183 = vsel %vm175, %v166, %v182
    %v184 = vsel %vm174, %v181, %v183
    %v185 = vsel %vm173, %v163, %v166
    %v186 = vsel %vm176, %v172, 1326507024
    %v187 = vsel %vm175, %v169, %v186
    %v188 = vsel %vm174, %v185, %v187
    %v189 = vshll.u32 %v149, 8
    %v190 = vmul.u32.u64.compose %v189, %v188
    %v191 = vextract.low.u32 %v190
    %v192 = vextract.high.u32 %v190
    %v193 = vmul.u32.u64.compose %v189, %v184
    %v194 = vextract.low.u32 %v193
    %v195 = vextract.high.u32 %v193
    %v196 = vmul.u32 %v189, %v180
    %v197 = vadd.s32 %v192, %v194
    %vm198 = vc.u32 %v192, %v194
    %v199 = vadd.s32 %v195, 1
    %v200 = vsel %vm198, %v199, %v195
    %v201 = vadd.s32 %v196, %v200
    %v202 = vadd.s32 %v201, 536870912
    %v203 = vshrl.u32 %v202, 30
    %v204 = vshll.u32 %v203, 30
    %v205 = vsub.s32 %v201, %v204
    %vm206 = vcmp.lt.s32.totalorder %v205, 0
    %v207 = vsub.s32 0, %v205
    %v208 = vsel %vm206, %v207, %v205
    %v209 = vclz %v208
    %v210 = vsub.s32 %v209, 2
    %vm211 = vcmp.gt.s32.totalorder 0, %v210
    %v212 = vsel %vm211, 0, %v210
    %v213 = vsub.s32 32, %v212
    %v214 = vshll.u32 %v205, %v212
    %v215 = vshrl.u32 %v197, %v213
    %v216 = vor.u32 %v214, %v215
    %v217 = vsub.s32 4294967266, %v212
    %v218 = vadd.s32 %v217, 127
    %v219 = vshll.u32 %v218, 23
    %v220 = vor.u32 4788187, %v219
    %v221 = vand.u32 2147483647, %v220
    %v223 = vcvt.s32.f32 %v216
    %v224 = vmul.f32 %v223, %v221
    %v225 = vxor.u32 %v224, 2147483648
    %v226 = vsel %vm143, %v225, %v224
    %v227 = vsub.s32 4, %v203
    %v228 = vsel %vm143, %v227, %v203
    %v229 = vsel %vm142, %v131, %v226
    %v230 = vsel %vm142, 0, %v228
    %v231 = vcosq.f32.pop %v229
    %v232 = vsinq.f32.pop %v229
    %vm233 = vweird.f32 %v131
    %v234 = vadd.s32 %v230, 3
    %v235 = vand.u32 %v234, 3
    %vm236 = vcmp.lt.s32.totalorder %v235, 2
    %vm237 = vcmp.eq.s32.totalorder %v235, 0
    %v238 = vxor.u32 %v232, 2147483648
    %v239 = vsel %vm237, %v231, %v238
    %vm240 = vcmp.eq.s32.totalorder %v235, 2
    %v241 = vxor.u32 %v231, 2147483648
    %v242 = vsel %vm240, %v241, %v232
    %v243 = vsel %vm236, %v239, %v242
    %v244 = vsel %vm233, nan, %v243
    %v245 = vand.u32 2147483647, %v136
    %vm246 = vcmp.le.f32.partialorder %v245, 0.7853982
    %vm247 = vcmp.lt.s32.totalorder %v136, 0
    %v248 = vand.u32 %v136, 2139095040
    %v249 = vshrl.u32 %v248, 23
    %v250 = vsub.s32 %v249, 127
    %v251 = vand.u32 2147483647, %v136
    %v252 = vand.u32 %v251, 8388607
    %v253 = vor.u32 %v252, 8388608
    %v254 = vsub.s32 0, %v253
    %v255 = vadd.s32 %v250, 1
    %vm256 = vcmp.gt.s32.totalorder %v255, 0
    %v257 = vsel %vm256, %v255, 0
    %v258 = vshrl.u32 %v257, 5
    %v259 = vand.u32 %v257, 31
    %v260 = vsub.s32 32, %v259
    %v261 = vshrl.u32 683565275, %v260
    %v262 = vshll.u32 683565275, %v259
    %v263 = vshrl.u32 2475754826, %v260
    %v264 = vor.u32 %v262, %v263
    %v265 = vshll.u32 2475754826, %v259
    %v266 = vshrl.u32 2131351028, %v260
    %v267 = vor.u32 %v265, %v266
    %v268 = vshll.u32 2131351028, %v259
    %v269 = vshrl.u32 2102212464, %v260
    %v270 = vor.u32 %v268, %v269
    %v271 = vshll.u32 2102212464, %v259
    %v272 = vshrl.u32 920167782, %v260
    %v273 = vor.u32 %v271, %v272
    %v274 = vshll.u32 920167782, %v259
    %v275 = vshrl.u32 1326507024, %v260
    %v276 = vor.u32 %v274, %v275
    %vm277 = vcmp.lt.s32.totalorder %v258, 1
    %vm278 = vcmp.lt.s32.totalorder %v258, 2
    %vm279 = vcmp.lt.s32.totalorder %v258, 3
    %vm280 = vcmp.lt.s32.totalorder %v258, 4
    %v281 = vsel %vm277, %v261, %v264
    %v282 = vsel %vm280, %v270, 2102212464
    %v283 = vsel %vm279, %v267, %v282
    %v284 = vsel %vm278, %v281, %v283
    %v285 = vsel %vm277, %v264, %v267
    %v286 = vsel %vm280, %v273, 920167782
    %v287 = vsel %vm279, %v270, %v286
    %v288 = vsel %vm278, %v285, %v287
    %v289 = vsel %vm277, %v267, %v270
    %v290 = vsel %vm280, %v276, 1326507024
    %v291 = vsel %vm279, %v273, %v290
    %v292 = vsel %vm278, %v289, %v291
    %v293 = vshll.u32 %v253, 8
    %v294 = vmul.u32.u64.compose %v293, %v292
    %v295 = vextract.low.u32 %v294
    %v296 = vextract.high.u32 %v294
    %v297 = vmul.u32.u64.compose %v293, %v288
    %v298 = vextract.low.u32 %v297
    %v299 = vextract.high.u32 %v297
    %v300 = vmul.u32 %v293, %v284
    %v301 = vadd.s32 %v296, %v298
    %vm302 = vc.u32 %v296, %v298
    %v303 = vadd.s32 %v299, 1
    %v304 = vsel %vm302, %v303, %v299
    %v305 = vadd.s32 %v300, %v304
    %v306 = vadd.s32 %v305, 536870912
    %v307 = vshrl.u32 %v306, 30
    %v308 = vshll.u32 %v307, 30
    %v309 = vsub.s32 %v305, %v308
    %vm310 = vcmp.lt.s32.totalorder %v309, 0
    %v311 = vsub.s32 0, %v309
    %v312 = vsel %vm310, %v311, %v309
    %v313 = vclz %v312
    %v314 = vsub.s32 %v313, 2
    %vm315 = vcmp.gt.s32.totalorder 0, %v314
    %v316 = vsel %vm315, 0, %v314
    %v317 = vsub.s32 32, %v316
    %v318 = vshll.u32 %v309, %v316
    %v319 = vshrl.u32 %v301, %v317
    %v320 = vor.u32 %v318, %v319
    %v321 = vsub.s32 4294967266, %v316
    %v322 = vadd.s32 %v321, 127
    %v323 = vshll.u32 %v322, 23
    %v324 = vor.u32 4788187, %v323
    %v325 = vand.u32 2147483647, %v324
    %v327 = vcvt.s32.f32 %v320
    %v328 = vmul.f32 %v327, %v325
    %v329 = vxor.u32 %v328, 2147483648
    %v330 = vsel %vm247, %v329, %v328
    %v331 = vsub.s32 4, %v307
    %v332 = vsel %vm247, %v331, %v307
    %v333 = vsel %vm246, %v136, %v330
    %v334 = vsel %vm246, 0, %v332
    %v335 = vcosq.f32.pop %v333
    %v336 = vsinq.f32.pop %v333
    %vm337 = vweird.f32 %v136
    %v338 = vadd.s32 %v334, 3
    %v339 = vand.u32 %v338, 3
    %vm340 = vcmp.lt.s32.totalorder %v339, 2
    %vm341 = vcmp.eq.s32.totalorder %v339, 0
    %v342 = vxor.u32 %v336, 2147483648
    %v343 = vsel %vm341, %v335, %v342
    %vm344 = vcmp.eq.s32.totalorder %v339, 2
    %v345 = vxor.u32 %v335, 2147483648
    %v346 = vsel %vm344, %v345, %v336
    %v347 = vsel %vm340, %v343, %v346
    %v348 = vsel %vm337, nan, %v347
    %v349 = vsel %vm140, 1, 0
    %v350 = vlaneseq
    %v351 = vshrl.u32 %v350, 7
    %v352 = vsub.s32 0, %v351
    %v353 = vrot.slane %v349, %v352
    %vm354 = vcmp.eq.s32.totalorder %v353, 1
    %v355 = vsel %vm354, %v131, %v244
    %v356 = vsel %vm354, %v136, %v348
    %357 = vst [vmem:[#allocation7] sm:$0xff] %v355
    %358 = vst [vmem:[#allocation7 + $0x8] sm:$0xff] %v356
    // Predicated region
    $region26: #{tpu_custom_call.1} parent=1 // pred_check
      _
    $region27: #{tpu_custom_call.1} parent=1 // pred_check_branch
      %360 = sbr.rel (0) target = $region29
    $region28: #{tpu_custom_call.1} parent=1 // pred_region
      %s362 = ssub.s32 256, 256
      %363 = vsyncadd [#allocation4], %s362
      %s364 = sshll.u32 [#allocation7], 4
      %s365 = int_to_ptr.vmem [resolvable:$true] %s364
      %370 = dma.vmem_to_hbm [thread:$0]  %s365, 256, %s4, [#allocation4], 128, 128, 8
    $region29: #{tpu_custom_call.1} parent=1 // pred_fallthru
      _
    // Predicated region
    $region30: #{tpu_custom_call.1} parent=1 // pred_check
      _
    $region31: #{tpu_custom_call.1} parent=1 // pred_check_branch
      %372 = sbr.rel (0) target = $region33
    $region32: #{tpu_custom_call.1} parent=1 // pred_region
      %373 = dma.done [#allocation4], 256
    $region33: #{tpu_custom_call.1} parent=1 // pred_fallthru
      _
    %374 = vsyncpa [#allocation3], 1
    %375 = vsyncpa [#allocation6], 1
    %376 = vsyncpa [#allocation4], 1

</llo_original>
